<compile_context>
chip_gen: v6e
topology: v6e:2x2x1
jax: 0.10.0
libtpu: 0.0.40
codegen_flags: <defaults>
</compile_context>

<pallas_src>
import functools

import numpy as np
import jax
import jax.numpy as jnp
from jax.experimental import pallas as pl
from jax.experimental.pallas import tpu as pltpu


# ----------------------------- Pallas kernel --------------------------------

_VMEM_BUDGET = 40 * 1024 * 1024   # conservative resident+pipeline budget (fits v7x)
_VMEM_LIMIT = 48 * 1024 * 1024    # scoped VMEM limit handed to Mosaic


def _make_gradcam_kernel(gpc, bg, bct, hw_valid, hwp, inv_hw):
    """Build the GradCAM kernel for fixed (channels-per-group, groups, tiles).

    Grid: 1-D over padded B*C tiles (reduction axis, 'arbitrary').
      g_ref   : (bct, hwp) gradient tile   (rows = batch*channel, native dtype)
      a_ref   : (bct, hwp) activation tile
      norm_ref: (bg, hwp) f32  relu + global min/max normalized map   (output)
      raw_ref : (bg, hwp) f32  pre-relu, pre-norm csaliency map       (output,
                                 doubles as the grid-resident accumulator)
    """

    def kernel(g_ref, a_ref, norm_ref, raw_ref):
        k = pl.program_id(0)

        @pl.when(k == 0)
        def _init():
            raw_ref[...] = jnp.zeros_like(raw_ref)

        # Native-dtype loads (bf16 halves HBM bytes); math in f32.
        g = g_ref[...].astype(jnp.float32)
        a = a_ref[...].astype(jnp.float32)

        # alpha = spatial mean of the gradients, one value per (b, c) row.
        # Padded HW columns are zero so the row-sum is unaffected.
        alpha = jnp.sum(g, axis=-1, keepdims=True) * inv_hw            # (bct, 1)

        # Group-selection matrix built in-kernel from iotas; range test instead
        # of an emulated int32 divide.  Rows of B*C padding map to no group.
        off = k * bct
        col = jax.lax.broadcasted_iota(jnp.int32, (bg, bct), 1) + off   # abs B*C row
        row = jax.lax.broadcasted_iota(jnp.int32, (bg, bct), 0)         # group row
        lo = row * gpc
        sel = jnp.logical_and(col >= lo, col < lo + gpc).astype(jnp.float32)

        # alpha applied as a lane broadcast (VPU filler under the DMA stream);
        # channel-group reduction runs on the MXU, accumulating into the
        # grid-resident raw output block (no separate scratch).
        raw_ref[...] += jnp.dot(sel, a * alpha,
                                preferred_element_type=jnp.float32)

        @pl.when(k == pl.num_programs(0) - 1)
        def _finalize():
            csal = raw_ref[...]
            r = jnp.maximum(csal, 0.0)
            if hw_valid == hwp:
                mn = jnp.min(r, keepdims=True)
                mx = jnp.max(r, keepdims=True)
            else:
                # Exclude zero-padded HW columns from the global min/max.
                lane = jax.lax.broadcasted_iota(jnp.int32, (bg, hwp), 1)
                valid = lane < hw_valid
                mn = jnp.min(jnp.where(valid, r, jnp.inf), keepdims=True)
                mx = jnp.max(jnp.where(valid, r, -jnp.inf), keepdims=True)
            norm_ref[...] = (r - mn) / (mx - mn + 1e-8)                 # exact divide

    return kernel


def _pick_bc_tile(bc, hwp, itemsize, bg):
    """Pick the B*C tile from an explicit VMEM budget (safe for v7x's 64 MiB).

    Returns (tile, padded_bc).  Prefers an exact divisor (no input pad copy);
    otherwise pads B*C up to a multiple of a budget-sized tile.
    """
    resident = 2 * bg * hwp * 4                   # norm + raw outputs, f32, grid-resident
    per_row = 2 * 2 * hwp * itemsize              # 2 inputs x 2 pipeline buffers
    max_rows = int(max(8, (_VMEM_BUDGET - resident) // per_row))
    max_rows = min(max_rows, 4096)
    if bc <= max_rows:
        return bc, bc                             # single grid step, no padding
    # Prefer an exact divisor (multiple of 8, not too small) -> no pad copy.
    t = (max_rows // 8) * 8
    floor = max(8, t // 4)
    while t >= floor:
        if bc % t == 0:
            return t, bc
        t -= 8
    # Fallback: pad B*C; padded rows are zeros (alpha = 0, sel maps to no group).
    t = max(8, (max_rows // 8) * 8)
    return t, pl.cdiv(bc, t) * t


def gradcam_maps(grad_act, act, nsplit):
    """Pallas hot path.

    grad_act, act: (B, C, H, W) (NCHW, matching PyTorch); any float dtype.
    returns: (normalized relu'd map, raw csaliency map), each (B, nsplit, H, W) f32.
    """
    b, c, h, w = grad_act.shape
    assert c % nsplit == 0
    bc, hw, bg = b * c, h * w, b * nsplit
    gpc = c // nsplit  # channels per group

    # No forced f32 upcast: stream inputs in their native dtype.
    g2 = grad_act.reshape(bc, hw)
    a2 = act.reshape(bc, hw)

    # Lane-dense last dim: pad HW up to a multiple of 128 (zeros, masked later).
    hwp = max(128, pl.cdiv(hw, 128) * 128)
    if hwp != hw:
        g2 = jnp.pad(g2, ((0, 0), (0, hwp - hw)))
        a2 = jnp.pad(a2, ((0, 0), (0, hwp - hw)))

    itemsize = max(g2.dtype.itemsize, a2.dtype.itemsize)
    bct, bc_pad = _pick_bc_tile(bc, hwp, itemsize, bg)
    if bc_pad != bc:
        g2 = jnp.pad(g2, ((0, bc_pad - bc), (0, 0)))
        a2 = jnp.pad(a2, ((0, bc_pad - bc), (0, 0)))

    kernel = _make_gradcam_kernel(gpc=gpc, bg=bg, bct=bct,
                                  hw_valid=hw, hwp=hwp, inv_hw=1.0 / hw)

    norm, raw = pl.pallas_call(
        kernel,
        out_shape=(jax.ShapeDtypeStruct((bg, hwp), jnp.float32),
                   jax.ShapeDtypeStruct((bg, hwp), jnp.float32)),
        grid_spec=pltpu.PrefetchScalarGridSpec(
            num_scalar_prefetch=0,
            grid=(bc_pad // bct,),
            in_specs=[pl.BlockSpec((bct, hwp), lambda k: (k, 0)),
                      pl.BlockSpec((bct, hwp), lambda k: (k, 0))],
            out_specs=[pl.BlockSpec((bg, hwp), lambda k: (0, 0)),
                       pl.BlockSpec((bg, hwp), lambda k: (0, 0))]),
        compiler_params=pltpu.CompilerParams(
            dimension_semantics=("arbitrary",),
            vmem_limit_bytes=_VMEM_LIMIT),
    )(g2, a2)

    norm = norm[:, :hw].reshape(b, nsplit, h, w)
    raw = raw[:, :hw].reshape(b, nsplit, h, w)
    return norm, raw


# --------------------- synthetic model + hook emulation ---------------------

def synthetic_forward(x, w_conv, w_fc):
    """Tiny synthetic model. Target layer = relu(1x1 conv); returns (logits, act)."""
    act = jax.nn.relu(jnp.einsum('oc,bchw->bohw', w_conv, x))            # (B, C, H, W)
    logits = jnp.einsum('bchw,ck->bk', act, w_fc) / (x.shape[2] * x.shape[3])
    return logits, act


@functools.partial(jax.jit, static_argnames=("nsplit", "class_idx"))
def _gradcam_device(x, w_conv, w_fc, nsplit, class_idx):
    """Entire GradCAM forward tail on-device (single dispatch, no host syncs)."""
    b, cin, h, w = x.shape
    logits, act = synthetic_forward(x, w_conv, w_fc)

    # hook emulation: gradient of the selected class score wrt target activations
    def tail(a):
        return jnp.einsum('bchw,ck->bk', a, w_fc) / (h * w)

    logits2, vjp_fn = jax.vjp(tail, act)
    if class_idx is None:
        clid = jnp.argmax(logits2[0]).astype(jnp.int32)   # stays on device
    else:
        clid = jnp.asarray(class_idx, dtype=jnp.int32)
    cotangent = jnp.zeros_like(logits2).at[:, clid].set(1.0)
    (grad_act,) = vjp_fn(cotangent)                                       # dScore/dAct

    # --- Pallas hot path ---
    nonup, csal = gradcam_maps(grad_act, act, nsplit)
    nonup16 = nonup.astype(jnp.float16)          # module returns float16; cast on device

    log = logits[:, clid]
    nlog = log / (1e-7 + jnp.sum(jnp.abs(logits)))
    return nonup16, csal, clid, log, nlog, grad_act, act


def gradcam_forward(x, w_conv, w_fc, nsplit=2, class_idx=None, use_dummy=True):
    nonup16, csal, clid, log, nlog, grad_act, act = _gradcam_device(
        x, w_conv, w_fc, nsplit=nsplit, class_idx=class_idx)

    # single device->host transfer for the numpy results the module returns
    nonup_h, csal_h, clid_h, log_h, nlog_h = jax.device_get(
        (nonup16, csal, clid, log, nlog))

    if use_dummy:
        m = np.zeros([1, 1, 32, 32], dtype=np.float16)
    else:
        m = csal_h.astype(np.float16)   # pre-relu, pre-norm csaliency_map (non-dummy branch)
    maps, rmaps = [m], [nonup_h]

    return (np.stack(maps, axis=2), rmaps, int(clid_h), log_h[0], nlog_h[0]), grad_act, act


# ------------------------------- reference ----------------------------------

def gradcam_maps_ref(grad_act, act, nsplit):
    b, c, h, w = grad_act.shape
    alpha = grad_act.reshape(b, c, -1).mean(axis=2).reshape(b, c, 1, 1)
    sal = alpha * act
    csal = sal.reshape(b, nsplit, c // nsplit, h, w).sum(axis=2)
    r = jnp.maximum(csal, 0.0)
    return (r - r.min()) / (r.max() - r.min() + 1e-8), csal


# --------------------------------- main --------------------------------------

if __name__ == "__main__":
    key = jax.random.PRNGKey(0)
    k1, k2, k3 = jax.random.split(key, 3)

    B, CIN, H, W = 2, 3, 16, 16           # small batch to exercise batch/group indexing
    C, NCLASS, NSPLIT = 8, 10, 2          # target-layer channels / classes / splits

    x = jax.random.normal(k1, (B, CIN, H, W), dtype=jnp.float32)
    w_conv = jax.random.normal(k2, (C, CIN), dtype=jnp.float32) * 0.1
    w_fc = jax.random.normal(k3, (C, NCLASS), dtype=jnp.float32) * 0.1

    (maps, rmaps, clid, log, nlog), grad_act, act = gradcam_forward(
        x, w_conv, w_fc, nsplit=NSPLIT, class_idx=None, use_dummy=True)
    jax.block_until_ready((grad_act, act))

    # correctness check of the Pallas hot path against pure-JAX reference
    ref_norm, ref_csal = gradcam_maps_ref(grad_act, act, NSPLIT)
    got_norm, got_csal = gradcam_maps(grad_act, act, NSPLIT)
    got_norm, got_csal = jax.block_until_ready((got_norm, got_csal))

    assert maps.shape == (1, 1, 1, 32, 32)
    got_rm = np.asarray(rmaps[0]).astype(np.float32)
    assert got_rm.shape == (B, NSPLIT, H, W)
    np.testing.assert_allclose(np.asarray(got_norm), np.asarray(ref_norm),
                               rtol=5e-3, atol=5e-3)
    np.testing.assert_allclose(np.asarray(got_csal), np.asarray(ref_csal),
                               rtol=5e-3, atol=5e-3)
    np.testing.assert_allclose(got_rm, np.asarray(ref_norm), rtol=5e-3, atol=5e-3)
    assert np.isfinite(log) and np.isfinite(nlog)

    print("KERNEL_OK")
</pallas_src>

<mosaic_0001>
module attributes {stable_mosaic.version = 11 : i64} {
  func.func @kernel(%arg0: i32, %arg1: memref<16x256xf32, #tpu.memory_space<vmem>>, %arg2: memref<16x256xf32, #tpu.memory_space<vmem>>, %arg3: memref<4x256xf32, #tpu.memory_space<vmem>>, %arg4: memref<4x256xf32, #tpu.memory_space<vmem>>) attributes {dimension_semantics = [#tpu.dimension_semantics<arbitrary>], iteration_bounds = array<i64: 1>, scalar_prefetch = 0 : i64, scratch_operands = 0 : i64, tpu.core_type = #tpu.core_type<tc>, window_params = [{transform_indices = @transform_0, window_bounds = array<i64: 16, 256>}, {transform_indices = @transform_1, window_bounds = array<i64: 16, 256>}, {pipeline_mode = #tpu.pipeline_mode<synchronous>, transform_indices = @transform_2, window_bounds = array<i64: 4, 256>}, {pipeline_mode = #tpu.pipeline_mode<synchronous>, transform_indices = @transform_3, window_bounds = array<i64: 4, 256>}]} {
    %c0_i32 = arith.constant 0 : i32
    %0 = arith.cmpi eq, %arg0, %c0_i32 : i32
    %1 = arith.extui %0 : i1 to i32
    %c0_i32_0 = arith.constant 0 : i32
    %2 = arith.cmpi ne, %1, %c0_i32_0 : i32
    scf.if %2 {
      %cst_13 = arith.constant 0.000000e+00 : f32
      %32 = vector.broadcast %cst_13 : f32 to vector<4x256xf32>
      %c0_14 = arith.constant 0 : index
      %c0_15 = arith.constant 0 : index
      %33 = vector.load %arg4[%c0_14, %c0_15] : memref<4x256xf32, #tpu.memory_space<vmem>>, vector<4x256xf32>
      tpu.vector_store %arg4[%c0_14, %c0_15], %32 {strides = array<i32>} : memref<4x256xf32, #tpu.memory_space<vmem>>, vector<4x256xf32>,
    } else {
    }
    %c0 = arith.constant 0 : index
    %c0_1 = arith.constant 0 : index
    %3 = vector.load %arg1[%c0, %c0_1] : memref<16x256xf32, #tpu.memory_space<vmem>>, vector<16x256xf32>
    %c0_2 = arith.constant 0 : index
    %c0_3 = arith.constant 0 : index
    %4 = vector.load %arg2[%c0_2, %c0_3] : memref<16x256xf32, #tpu.memory_space<vmem>>, vector<16x256xf32>
    %cst = arith.constant dense<0.000000e+00> : vector<16xf32>
    %5 = vector.multi_reduction <add>, %3, %cst [1] : vector<16x256xf32> to vector<16xf32>
    %6 = vector.shape_cast %5 : vector<16xf32> to vector<16x1xf32>
    %cst_4 = arith.constant 3.906250e-03 : f32
    %7 = vector.broadcast %cst_4 : f32 to vector<16x1xf32>
    %8 = arith.mulf %6, %7 : vector<16x1xf32>
    %c16_i32 = arith.constant 16 : i32
    %9 = arith.muli %arg0, %c16_i32 : i32
    %10 = tpu.iota {dimensions = array<i32: 1>} : vector<4x16xi32>
    %11 = vector.broadcast %9 : i32 to vector<4x16xi32>
    %12 = arith.addi %10, %11 : vector<4x16xi32>
    %13 = tpu.iota {dimensions = array<i32: 0>} : vector<4x16xi32>
    %c4_i32 = arith.constant 4 : i32
    %14 = vector.broadcast %c4_i32 : i32 to vector<4x16xi32>
    %15 = arith.muli %13, %14 : vector<4x16xi32>
    %16 = arith.cmpi sge, %12, %15 : vector<4x16xi32>
    %c4_i32_5 = arith.constant 4 : i32
    %17 = vector.broadcast %c4_i32_5 : i32 to vector<4x16xi32>
    %18 = arith.addi %15, %17 : vector<4x16xi32>
    %19 = arith.cmpi slt, %12, %18 : vector<4x16xi32>
    %20 = arith.andi %16, %19 : vector<4x16xi1>
    %21 = arith.extui %20 : vector<4x16xi1> to vector<4x16xi32>
    %22 = arith.sitofp %21 : vector<4x16xi32> to vector<4x16xf32>
    %c0_6 = arith.constant 0 : index
    %c0_7 = arith.constant 0 : index
    %23 = vector.load %arg4[%c0_6, %c0_7] : memref<4x256xf32, #tpu.memory_space<vmem>>, vector<4x256xf32>
    %24 = vector.broadcast %8 : vector<16x1xf32> to vector<16x256xf32>
    %25 = arith.mulf %4, %24 : vector<16x256xf32>
    %cst_8 = arith.constant dense<0.000000e+00> : vector<4x256xf32>
    %26 = tpu.matmul %22, %25, %cst_8 {dimension_numbers = #tpu.dot_dimension_numbers<[1], [0], [0], [1], [0, 0, 1, 1], [], []>} : vector<4x16xf32>, vector<16x256xf32>, vector<4x256xf32> -> vector<4x256xf32>
    %27 = arith.addf %23, %26 : vector<4x256xf32>
    %c0_9 = arith.constant 0 : index
    %c0_10 = arith.constant 0 : index
    %28 = vector.load %arg4[%c0_9, %c0_10] : memref<4x256xf32, #tpu.memory_space<vmem>>, vector<4x256xf32>
    tpu.vector_store %arg4[%c0_9, %c0_10], %27 {strides = array<i32>} : memref<4x256xf32, #tpu.memory_space<vmem>>, vector<4x256xf32>,
    %c0_i32_11 = arith.constant 0 : i32
    %29 = arith.cmpi eq, %arg0, %c0_i32_11 : i32
    %30 = arith.extui %29 : i1 to i32
    %c0_i32_12 = arith.constant 0 : i32
    %31 = arith.cmpi ne, %30, %c0_i32_12 : i32
    scf.if %31 {
      %c0_13 = arith.constant 0 : index
      %c0_14 = arith.constant 0 : index
      %32 = vector.load %arg4[%c0_13, %c0_14] : memref<4x256xf32, #tpu.memory_space<vmem>>, vector<4x256xf32>
      %cst_15 = arith.constant 0.000000e+00 : f32
      %33 = vector.broadcast %cst_15 : f32 to vector<4x256xf32>
      %34 = arith.maximumf %32, %33 : vector<4x256xf32>
      %35 = vector.shape_cast %34 : vector<4x256xf32> to vector<1x4x256xf32>
      %cst_16 = arith.constant dense<0x7F800000> : vector<1xf32>
      %36 = vector.multi_reduction <minimumf>, %35, %cst_16 [1, 2] : vector<1x4x256xf32> to vector<1xf32>
      %37 = vector.shape_cast %36 : vector<1xf32> to vector<1x1x1xf32>
      %38 = vector.extract %37[0, 0, 0] : f32 from vector<1x1x1xf32>
      %39 = vector.broadcast %38 : f32 to vector<1x1xf32>
      %40 = vector.shape_cast %34 : vector<4x256xf32> to vector<1x4x256xf32>
      %cst_17 = arith.constant dense<0xFF800000> : vector<1xf32>
      %41 = vector.multi_reduction <maximumf>, %40, %cst_17 [1, 2] : vector<1x4x256xf32> to vector<1xf32>
      %42 = vector.shape_cast %41 : vector<1xf32> to vector<1x1x1xf32>
      %43 = vector.extract %42[0, 0, 0] : f32 from vector<1x1x1xf32>
      %44 = vector.broadcast %43 : f32 to vector<1x1xf32>
      %45 = vector.broadcast %39 : vector<1x1xf32> to vector<4x256xf32>
      %46 = arith.subf %34, %45 : vector<4x256xf32>
      %47 = arith.subf %44, %39 : vector<1x1xf32>
      %cst_18 = arith.constant 9.99999993E-9 : f32
      %48 = vector.broadcast %cst_18 : f32 to vector<1x1xf32>
      %49 = arith.addf %47, %48 : vector<1x1xf32>
      %50 = vector.broadcast %49 : vector<1x1xf32> to vector<4x256xf32>
      %51 = arith.divf %46, %50 : vector<4x256xf32>
      %c0_19 = arith.constant 0 : index
      %c0_20 = arith.constant 0 : index
      %52 = vector.load %arg3[%c0_19, %c0_20] : memref<4x256xf32, #tpu.memory_space<vmem>>, vector<4x256xf32>
      tpu.vector_store %arg3[%c0_19, %c0_20], %51 {strides = array<i32>} : memref<4x256xf32, #tpu.memory_space<vmem>>, vector<4x256xf32>,
    } else {
    }
    return
  }
  func.func @transform_0(%arg0: i32) -> (i32, i32) {
    %c0_i32 = arith.constant 0 : i32
    %c0_i32_0 = arith.constant 0 : i32
    return %arg0, %c0_i32 : i32, i32
  }
  func.func @transform_1(%arg0: i32) -> (i32, i32) {
    %c0_i32 = arith.constant 0 : i32
    %c0_i32_0 = arith.constant 0 : i32
    return %arg0, %c0_i32 : i32, i32
  }
  func.func @transform_2(%arg0: i32) -> (i32, i32) {
    %c0_i32 = arith.constant 0 : i32
    %c0_i32_0 = arith.constant 0 : i32
    %c0_i32_1 = arith.constant 0 : i32
    return %c0_i32, %c0_i32_0 : i32, i32
  }
  func.func @transform_3(%arg0: i32) -> (i32, i32) {
    %c0_i32 = arith.constant 0 : i32
    %c0_i32_0 = arith.constant 0 : i32
    %c0_i32_1 = arith.constant 0 : i32
    return %c0_i32, %c0_i32_0 : i32, i32
  }
}

</mosaic_0001>

<llo_original>
// kernel: _gradcam_device.1
$region0: #{_gradcam_device.1}
  #allocation0 [shape = 'u32[]', space=smem, size = 0x4, offset = 0x4, fixed_abs, tag = 'smem constant byte address 0x4 - core index']
  #allocation1 [shape = 'u32[144,128]{1,0:T(1,128)}', space=vmem, size = 0x12000, scoped, tag = 'internal scratch']
  %s0 = inlined_call_operand.vmem [shape: f32[16,256], index: 0, kind: input, shape index: {}]
  %s1 = inlined_call_operand.vmem [shape: f32[16,256], index: 1, kind: input, shape index: {}]
  %s2 = inlined_call_operand.vmem [shape: f32[4,256], index: 2, kind: output, shape index: {0}]
  %s3 = inlined_call_operand.vmem [shape: f32[4,256], index: 3, kind: output, shape index: {1}]
  %4 = xla_tuple %s2, %s3
  %s5 = sld [smem:[#allocation0]]
  $region34: #{_gradcam_device.1} parent=0
    _
  %s7 = ssub.s32 1, %s5
  %s8 = scalar_select 0, %s7, %s5
  // Predicated region
  $region2: #{_gradcam_device.1} parent=0 // pred_check
    _
  $region3: #{_gradcam_device.1} parent=0 // pred_check_branch
    %10 = sbr.rel (0) target = $region5
  $region4: #{_gradcam_device.1} parent=0 // pred_region
    _
  $region5: #{_gradcam_device.1} parent=0 // pred_fallthru
    _
  // Predicated region
  $region6: #{_gradcam_device.1} parent=0 // pred_check
    _
  $region7: #{_gradcam_device.1} parent=0 // pred_check_branch
    %12 = sbr.rel (0) target = $region9
  $region8: #{_gradcam_device.1} parent=0 // pred_region
    _
  $region9: #{_gradcam_device.1} parent=0 // pred_fallthru
    _
  %p13 = scmp.eq.s32.totalorder 0, 0
  // Predicated region
  $region10: #{_gradcam_device.1} parent=0 // pred_check
    %p14 = pneg %p13
  $region11: #{_gradcam_device.1} parent=0 // pred_check_branch
    %16 = sbr.rel (%p14) target = $region13
  $region12: #{_gradcam_device.1} parent=0 // pred_region
    %17 = vst [vmem:[%s3] sm:$0xff] 0.0
  $region13: #{_gradcam_device.1} parent=0 // pred_fallthru
    _
  %v18 = vld [vmem:[%s0] sm:$0xff]
  %v19 = vld [vmem:[%s0 + $0x8] sm:$0xff]
  %v20 = vld [vmem:[%s0 + $0x10] sm:$0xff]
  %v21 = vld [vmem:[%s0 + $0x18] sm:$0xff]
  %v22 = vld [vmem:[%s1] sm:$0xff]
  %v23 = vld [vmem:[%s1 + $0x8] sm:$0xff]
  %v24 = vld [vmem:[%s1 + $0x10] sm:$0xff]
  %v25 = vld [vmem:[%s1 + $0x18] sm:$0xff]
  %v26 = vadd.f32 %v18, %v19
  %27 = vadd.xlane.f32.xlu0 %v26
  %v28 = vpop.xlane.xlu0 %27
  %v29 = vadd.f32 %v20, %v21
  %30 = vadd.xlane.f32.xlu0 %v29
  %v31 = vpop.xlane.xlu0 %30
  %v32 = vmul.f32 %v28, 0.00390625
  %v33 = vmul.f32 %v31, 0.00390625
  %s34 = smul.u32 0, 16
  %v35 = vlaneseq
  %v36 = vand.u32 %v35, 127
  %v37 = vstv %s34
  %v38 = vadd.s32 %v36, %v37
  %v39 = vlaneseq
  %v40 = vshrl.u32 %v39, 7
  %v41 = vmul.u32 %v40, 4
  %vm42 = vcmp.ge.s32.totalorder %v38, %v41
  %v43 = vadd.s32 %v41, 4
  %vm44 = vcmp.lt.s32.totalorder %v38, %v43
  %vm45 = vmand %vm42, %vm44
  %v46 = vsel %vm45, 1, 0
  %v47 = vcvt.s32.f32 %v46
  %v48 = vld [vmem:[%s3] sm:$0xff]
  %v49 = vmul.f32 %v22, %v32
  %v50 = vmul.f32 %v23, %v32
  %v51 = vmul.f32 %v24, %v33
  %v52 = vmul.f32 %v25, %v33
  %vm53 = vcmask 130048
  %v55 = vsel %vm53, %v47, 0
  %57 = vmatprep.subr.mxu0 0.0
  %58 = vmatpush1.msra.mxu0 0.0
  %59 = vmatprep.subr.mxu0 0.0
  %60 = vmatpush1.msra.mxu0 0.0
  %61 = vmatprep.subr.mxu0 0.0
  %62 = vmatpush1.msra.mxu0 0.0
  %63 = vmatprep.subr.mxu0 0.0
  %64 = vmatpush1.msra.mxu0 0.0
  %65 = vmatprep.subr.mxu0 0.0
  %66 = vmatpush1.msra.mxu0 0.0
  %67 = vmatprep.subr.mxu0 0.0
  %68 = vmatpush1.msra.mxu0 0.0
  %69 = vmatprep.subr.mxu0 0.0
  %70 = vmatpush1.msra.mxu0 0.0
  %71 = vmatprep.subr.mxu0 0.0
  %72 = vmatpush1.msra.mxu0 0.0
  %73 = vmatprep.subr.mxu0 0.0
  %74 = vmatpush1.msra.mxu0 0.0
  %75 = vmatprep.subr.mxu0 0.0
  %76 = vmatpush1.msra.mxu0 0.0
  %77 = vmatprep.subr.mxu0 0.0
  %78 = vmatpush1.msra.mxu0 0.0
  %79 = vmatprep.subr.mxu0 0.0
  %80 = vmatpush1.msra.mxu0 0.0
  %81 = vmatprep.subr.mxu0 0.0
  %82 = vmatpush1.msra.mxu0 0.0
  %83 = vmatprep.subr.mxu0 0.0
  %84 = vmatpush1.msra.mxu0 0.0
  %85 = vmatprep.subr.mxu0 %v52
  %86 = vmatpush1.msra.mxu0 %v51
  %87 = vmatprep.subr.mxu0 %v50
  %88 = vmatpush1.msra.mxu0 %v49
  %89 = vmatprep.subr.mxu0 0.0
  %90 = vmatpush2.msra.mxu0 0.0
  %91 = vmatprep.subr.mxu0 0.0
  %92 = vmatpush2.msra.mxu0 0.0
  %93 = vmatprep.subr.mxu0 0.0
  %94 = vmatpush2.msra.mxu0 0.0
  %95 = vmatprep.subr.mxu0 0.0
  %96 = vmatpush2.msra.mxu0 0.0
  %97 = vmatprep.subr.mxu0 0.0
  %98 = vmatpush2.msra.mxu0 0.0
  %99 = vmatprep.subr.mxu0 0.0
  %100 = vmatpush2.msra.mxu0 0.0
  %101 = vmatprep.subr.mxu0 0.0
  %102 = vmatpush2.msra.mxu0 0.0
  %103 = vmatprep.subr.mxu0 0.0
  %104 = vmatpush2.msra.mxu0 0.0
  %105 = vmatprep.subr.mxu0 0.0
  %106 = vmatpush2.msra.mxu0 0.0
  %107 = vmatprep.subr.mxu0 0.0
  %108 = vmatpush2.msra.mxu0 0.0
  %109 = vmatprep.subr.mxu0 0.0
  %110 = vmatpush2.msra.mxu0 0.0
  %111 = vmatprep.subr.mxu0 0.0
  %112 = vmatpush2.msra.mxu0 0.0
  %113 = vmatprep.subr.mxu0 0.0
  %114 = vmatpush2.msra.mxu0 0.0
  %115 = vmatprep.subr.mxu0 0.0
  %116 = vmatpush2.msra.mxu0 0.0
  %117 = vmatprep.subr.mxu0 0.0
  %118 = vmatpush2.msra.mxu0 0.0
  %119 = vmatprep.subr.mxu0 0.0
  %120 = vmatpush2.msra.mxu0 0.0
  %121 = vmatprep.mubr.f32.mxu0 0.0
  %122 = vmatmul.mubr.f32.gmra.mxu0 %v55
  %v123 = vpop.f32.mrf.mxu0
  %v124 = vadd.f32 0.0, %v123
  %v125 = vpop.f32.mrf.mxu0
  %v126 = vadd.f32 0.0, %v125
  %127 = vdwg.mxu0
  %v130 = vcombine.low %v124, %v126
  %v132 = vadd.f32 %v48, %v130
  %133 = vst [vmem:[%s3] sm:$0xff] %v132
  // Predicated region
  $region14: #{_gradcam_device.1} parent=0 // pred_check
    %p134 = pneg %p13
  $region15: #{_gradcam_device.1} parent=0 // pred_check_branch
    %136 = sbr.rel (%p134) target = $region17
  $region16: #{_gradcam_device.1} parent=0 // pred_region
    %v137 = vld [vmem:[%s3] sm:$0xff]
    %v138 = vmax.f32 %v137, 0.0
    %v140 = vcombine.high %v138, %v138
    %vm142 = vcmask 1043456
    %v143 = vsel %vm142, %v138, inf
    %v144 = vsel %vm142, %v140, inf
    %v145 = vmin.f32 %v143, %v144
    %146 = vmin.xlane.f32.xlu0 %v145
    %v147 = vpop.xlane.xlu0 %146
    %v148 = vrot.slane %v147, 4
    %v149 = vmin.f32 %v147, %v148
    %v150 = vrot.slane %v149, 2
    %v151 = vmin.f32 %v149, %v150
    %v152 = vrot.slane %v151, 1
    %v153 = vmin.f32 %v151, %v152
    %s154 = vtos %v153
    %v155 = vstv %s154
    %v156 = vsel %vm142, %v138, -inf
    %v157 = vsel %vm142, %v140, -inf
    %v158 = vmax.f32 %v156, %v157
    %159 = vmax.xlane.f32.xlu0 %v158
    %v160 = vpop.xlane.xlu0 %159
    %v161 = vrot.slane %v160, 4
    %v162 = vmax.f32 %v160, %v161
    %v163 = vrot.slane %v162, 2
    %v164 = vmax.f32 %v162, %v163
    %v165 = vrot.slane %v164, 1
    %v166 = vmax.f32 %v164, %v165
    %s167 = vtos %v166
    %v168 = vstv %s167
    %v169 = vsub.f32 %v138, %v155
    %v170 = vsub.f32 %v168, %v155
    %v171 = vadd.f32 %v170, 1e-08
    %v172 = vrcp.pop %v171
    %v173 = vmul.f32 %v169, %v172
    %174 = vst [vmem:[%s2] sm:$0xff] %v173
  $region17: #{_gradcam_device.1} parent=0 // pred_fallthru
    _
  // Predicated region
  $region18: #{_gradcam_device.1} parent=0 // pred_check
    _
  $region19: #{_gradcam_device.1} parent=0 // pred_check_branch
    %176 = sbr.rel (0) target = $region21
  $region20: #{_gradcam_device.1} parent=0 // pred_region
    _
  $region21: #{_gradcam_device.1} parent=0 // pred_fallthru
    _
  // Predicated region
  $region22: #{_gradcam_device.1} parent=0 // pred_check
    _
  $region23: #{_gradcam_device.1} parent=0 // pred_check_branch
    %178 = sbr.rel (0) target = $region25
  $region24: #{_gradcam_device.1} parent=0 // pred_region
    _
  $region25: #{_gradcam_device.1} parent=0 // pred_fallthru
    _
  // Predicated region
  $region26: #{_gradcam_device.1} parent=0 // pred_check
    _
  $region27: #{_gradcam_device.1} parent=0 // pred_check_branch
    %180 = sbr.rel (0) target = $region29
  $region28: #{_gradcam_device.1} parent=0 // pred_region
    _
  $region29: #{_gradcam_device.1} parent=0 // pred_fallthru
    _
  // Predicated region
  $region30: #{_gradcam_device.1} parent=0 // pred_check
    _
  $region31: #{_gradcam_device.1} parent=0 // pred_check_branch
    %182 = sbr.rel (0) target = $region33
  $region32: #{_gradcam_device.1} parent=0 // pred_region
    _
  $region33: #{_gradcam_device.1} parent=0 // pred_fallthru
    _

</llo_original>
